<compile_context>
chip_gen: v5e
topology: v5e:2x2
jax: 0.10.0
libtpu: 0.0.40
codegen_flags: <defaults>
</compile_context>

<pallas_src>
import functools

import jax
import jax.numpy as jnp
import numpy as np
from jax import lax
from jax.experimental import pallas as pl
from jax.experimental.pallas import tpu as pltpu


def _fused_attn_kernel(x_ref, wqkv_ref, bqkv_ref, smask_ref, hmask_ref,
                       gsum_ref, wo_ref, bo_ref, out_ref):
    """One grid step = one chunk of Bb batches.

    x_ref    : (N, d)     raw-view rows, N = Bb*n_heads*S; row q corresponds to
                          (batch q//(g*S), head (q%(g*S))//S, position q%S).
    wqkv_ref : (d, H+2d)  [tile_g(Wv^T) | Wq^T/sqrt(d) | Wk^T]      (resident)
    bqkv_ref : (1, H+2d)  matching biases                            (resident)
    smask_ref: (N, N)     0 where rows share a (batch, head) block, -1e30 else
    hmask_ref: (N, H)     1 where lane block h//d == row's own column q%g
    gsum_ref : (M, N)     1 where q//g == r  (sums each output row's g rows)
    wo_ref   : (H, H)     Wo^T                                       (resident)
    bo_ref   : (1, H)
    out_ref  : (M, H)     lane-dense output slab, M = Bb*S.
    """
    _, d = x_ref.shape
    _, H = out_ref.shape

    x = x_ref[...]

    # ---- fused projections: one MXU push yields tiled V, pre-scaled Q, K ----
    qkv = jnp.dot(x, wqkv_ref[...], preferred_element_type=jnp.float32)
    qkv = qkv + bqkv_ref[...]
    vt = qkv[:, :H]                 # (N, H): V copied into every head-column block
    q = qkv[:, H:H + d]             # (N, d): already scaled by 1/sqrt(d)
    k = qkv[:, H + d:H + 2 * d]     # (N, d)

    # ---- attention scores (one matmul + resident block-diagonal mask) -------
    scores = lax.dot_general(q, k, (((1,), (1,)), ((), ())),
                             preferred_element_type=jnp.float32)
    scores = scores + smask_ref[...]

    # ---- softmax (max-subtracted; exact EUP reciprocal) ----------------------
    m = jnp.max(scores, axis=-1, keepdims=True)
    e = jnp.exp(scores - m)                       # masked entries underflow to 0
    attn = e * pl.reciprocal(jnp.sum(e, axis=-1, keepdims=True), approx=False)

    # ---- context + raw .view fold + output projection ------------------------
    # attn @ V_tiled puts each row's context into every head-column block; the
    # head mask keeps only the row's own block, and the (M, N) group-sum matmul
    # gathers rows r*g .. r*g+g-1 into output row r.  z equals ctx.view(B,S,H)
    # for this chunk, so the output projection is one full-contraction matmul.
    ctx_t = jnp.dot(attn, vt, preferred_element_type=jnp.float32) * hmask_ref[...]
    z = jnp.dot(gsum_ref[...], ctx_t, preferred_element_type=jnp.float32)
    out_ref[...] = (jnp.dot(z, wo_ref[...], preferred_element_type=jnp.float32)
                    + bo_ref[...])


def prepare_attention_params(params, n_heads):
    """One-time weight preparation (hoisted out of the per-call path)."""
    H = params["wo"].shape[0]
    d = H // n_heads
    scale = np.float32(1.0) / np.sqrt(np.float32(d))
    wqkv_t = jnp.concatenate(
        [jnp.tile(params["wv"].T, (1, n_heads)),        # (d, H) tiled V weight
         params["wq"].T * scale,                        # (d, d) scale folded in
         params["wk"].T],                               # (d, d)
        axis=1)
    bqkv = jnp.concatenate(
        [jnp.tile(params["bv"], (1, n_heads)),
         params["bq"] * scale,
         params["bk"]],
        axis=1)
    return {"wqkv_t": wqkv_t, "bqkv": bqkv,
            "wo_t": params["wo"].T, "bo": params["bo"]}


@functools.lru_cache(maxsize=None)
def _fold_constants(n_batch_per_chunk, n_heads, seq_len, head_dim):
    """Resident constants: score mask, head-column mask, row-group-sum matrix."""
    g, S, d = n_heads, seq_len, head_dim
    N = n_batch_per_chunk * g * S
    M = n_batch_per_chunk * S
    H = g * d
    qi = np.arange(N)
    blk = qi // S                                         # (batch, head) block id
    smask = np.where(blk[:, None] == blk[None, :], 0.0, -1e30).astype(np.float32)
    hmask = (np.arange(H)[None, :] // d == (qi[:, None] % g)).astype(np.float32)
    gsum = (qi[None, :] // g == np.arange(M)[:, None]).astype(np.float32)
    return jnp.asarray(smask), jnp.asarray(hmask), jnp.asarray(gsum)


def attention_context(x, prepared, n_heads, num_chunks=None):
    """Pallas implementation of AttentionContext.forward (single fused kernel)."""
    B, S, H = x.shape
    assert H % n_heads == 0, "hidden_dim should be divisible by n_heads"
    d = H // n_heads
    rows_per_batch = n_heads * S

    if num_chunks is None:
        # Two 'parallel' grid steps let v7x's two TensorCores split the batch,
        # but only when each chunk still fills the MXU row dim (>=128 rows);
        # otherwise fold everything into one fat step (single-TC v5e/v6e always
        # prefer fewer, fatter steps).
        num_chunks = 2 if (B % 2 == 0 and (B // 2) * rows_per_batch >= 128) else 1
    assert B % num_chunks == 0
    Bb = B // num_chunks
    N = Bb * rows_per_batch          # input rows per grid step
    M = Bb * S                       # output rows per grid step

    smask, hmask, gsum = _fold_constants(Bb, n_heads, S, d)

    # torch's x.view(B, n_heads, S, d), flattened over (batch, head, pos):
    # a free contiguous reinterpretation done once in the wrapper.
    x2 = x.reshape(B * rows_per_batch, d)

    out = pl.pallas_call(
        _fused_attn_kernel,
        out_shape=jax.ShapeDtypeStruct((B * S, H), jnp.float32),
        grid=(num_chunks,),
        in_specs=[
            pl.BlockSpec((N, d), lambda c: (c, 0)),            # x chunk
            pl.BlockSpec((d, H + 2 * d), lambda c: (0, 0)),    # fused weights
            pl.BlockSpec((1, H + 2 * d), lambda c: (0, 0)),    # fused biases
            pl.BlockSpec((N, N), lambda c: (0, 0)),            # score mask
            pl.BlockSpec((N, H), lambda c: (0, 0)),            # head-col mask
            pl.BlockSpec((M, N), lambda c: (0, 0)),            # group-sum
            pl.BlockSpec((H, H), lambda c: (0, 0)),            # Wo^T
            pl.BlockSpec((1, H), lambda c: (0, 0)),            # bo
        ],
        out_specs=pl.BlockSpec((M, H), lambda c: (c, 0)),      # lane-dense slab
        compiler_params=pltpu.CompilerParams(
            dimension_semantics=("parallel",)),
    )(x2, prepared["wqkv_t"], prepared["bqkv"], smask, hmask, gsum,
      prepared["wo_t"], prepared["bo"])

    return out.reshape(B, S, H)


# ----------------------------------------------------------------------------
# Pure-JAX reference (mirrors the PyTorch forward exactly) for verification.
# ----------------------------------------------------------------------------
def attention_context_ref(x, params, n_heads):
    B, S, H = x.shape
    d = H // n_heads
    xh = x.reshape(B, n_heads, S, d)
    q = xh @ params["wq"].T + params["bq"][0]
    k = xh @ params["wk"].T + params["bk"][0]
    v = xh @ params["wv"].T + params["bv"][0]
    scores = (q @ jnp.swapaxes(k, -1, -2)) / jnp.sqrt(jnp.float32(d))
    attn = jax.nn.softmax(scores, axis=-1)
    ctx = (attn @ v).reshape(B, S, H)
    return ctx @ params["wo"].T + params["bo"][0]


def init_params(key, hidden_dim, n_heads):
    d = hidden_dim // n_heads
    ks = jax.random.split(key, 8)

    def u(k, shape, fan_in):
        bound = 1.0 / jnp.sqrt(jnp.float32(fan_in))
        return jax.random.uniform(k, shape, jnp.float32, -bound, bound)

    return {
        "wq": u(ks[0], (d, d), d), "bq": u(ks[1], (1, d), d),
        "wk": u(ks[2], (d, d), d), "bk": u(ks[3], (1, d), d),
        "wv": u(ks[4], (d, d), d), "bv": u(ks[5], (1, d), d),
        "wo": u(ks[6], (hidden_dim, hidden_dim), hidden_dim),
        "bo": u(ks[7], (1, hidden_dim), hidden_dim),
    }


if __name__ == "__main__":
    # Small but lane-friendly shapes: H = 128 keeps the output lane-dense and
    # the folded row dimension (B*n_heads*S = 128) fills the MXU row dim.
    B, S, H, n_heads = 2, 16, 128, 4

    key = jax.random.PRNGKey(0)
    kx, kp = jax.random.split(key)
    x = jax.random.normal(kx, (B, S, H), dtype=jnp.float32)
    params = init_params(kp, H, n_heads)

    prepared = prepare_attention_params(params, n_heads)   # one-time prep
    out = attention_context(x, prepared, n_heads)
    out = jax.block_until_ready(out)

    ref = attention_context_ref(x, params, n_heads)
    assert out.shape == (B, S, H)
    assert jnp.allclose(out, ref, atol=2e-3, rtol=2e-3), (
        float(jnp.max(jnp.abs(out - ref))))

    print("KERNEL_OK")
</pallas_src>

<mosaic_0001>
module attributes {stable_mosaic.version = 11 : i64} {
  func.func @_fused_attn_kernel(%arg0: i32, %arg1: memref<128x32xf32, #tpu.memory_space<vmem>>, %arg2: memref<32x192xf32, #tpu.memory_space<vmem>>, %arg3: memref<1x192xf32, #tpu.memory_space<vmem>>, %arg4: memref<128x128xf32, #tpu.memory_space<vmem>>, %arg5: memref<128x128xf32, #tpu.memory_space<vmem>>, %arg6: memref<32x128xf32, #tpu.memory_space<vmem>>, %arg7: memref<128x128xf32, #tpu.memory_space<vmem>>, %arg8: memref<1x128xf32, #tpu.memory_space<vmem>>, %arg9: memref<32x128xf32, #tpu.memory_space<vmem>>) attributes {dimension_semantics = [#tpu.dimension_semantics<parallel>], iteration_bounds = array<i64: 1>, scalar_prefetch = 0 : i64, scratch_operands = 0 : i64, tpu.core_type = #tpu.core_type<tc>, window_params = [{transform_indices = @transform_0, window_bounds = array<i64: 128, 32>}, {pipeline_mode = #tpu.pipeline_mode<synchronous>, transform_indices = @transform_1, window_bounds = array<i64: 32, 192>}, {pipeline_mode = #tpu.pipeline_mode<synchronous>, transform_indices = @transform_2, window_bounds = array<i64: 1, 192>}, {pipeline_mode = #tpu.pipeline_mode<synchronous>, transform_indices = @transform_3, window_bounds = array<i64: 128, 128>}, {pipeline_mode = #tpu.pipeline_mode<synchronous>, transform_indices = @transform_4, window_bounds = array<i64: 128, 128>}, {pipeline_mode = #tpu.pipeline_mode<synchronous>, transform_indices = @transform_5, window_bounds = array<i64: 32, 128>}, {pipeline_mode = #tpu.pipeline_mode<synchronous>, transform_indices = @transform_6, window_bounds = array<i64: 128, 128>}, {pipeline_mode = #tpu.pipeline_mode<synchronous>, transform_indices = @transform_7, window_bounds = array<i64: 1, 128>}, {transform_indices = @transform_8, window_bounds = array<i64: 32, 128>}]} {
    %c0 = arith.constant 0 : index
    %c0_0 = arith.constant 0 : index
    %0 = vector.load %arg1[%c0, %c0_0] : memref<128x32xf32, #tpu.memory_space<vmem>>, vector<128x32xf32>
    %c0_1 = arith.constant 0 : index
    %c0_2 = arith.constant 0 : index
    %1 = vector.load %arg2[%c0_1, %c0_2] : memref<32x192xf32, #tpu.memory_space<vmem>>, vector<32x192xf32>
    %cst = arith.constant dense<0.000000e+00> : vector<128x192xf32>
    %2 = tpu.matmul %0, %1, %cst {dimension_numbers = #tpu.dot_dimension_numbers<[1], [0], [0], [1], [0, 0, 1, 1], [], []>} : vector<128x32xf32>, vector<32x192xf32>, vector<128x192xf32> -> vector<128x192xf32>
    %c0_3 = arith.constant 0 : index
    %c0_4 = arith.constant 0 : index
    %3 = vector.load %arg3[%c0_3, %c0_4] : memref<1x192xf32, #tpu.memory_space<vmem>>, vector<1x192xf32>
    %4 = vector.broadcast %3 : vector<1x192xf32> to vector<128x192xf32>
    %5 = arith.addf %2, %4 : vector<128x192xf32>
    %6 = vector.extract_strided_slice %5 {offsets = [0, 0], sizes = [128, 128], strides = [1, 1]} : vector<128x192xf32> to vector<128x128xf32>
    %7 = vector.extract_strided_slice %5 {offsets = [0, 128], sizes = [128, 32], strides = [1, 1]} : vector<128x192xf32> to vector<128x32xf32>
    %8 = vector.extract_strided_slice %5 {offsets = [0, 160], sizes = [128, 32], strides = [1, 1]} : vector<128x192xf32> to vector<128x32xf32>
    %cst_5 = arith.constant dense<0.000000e+00> : vector<128x128xf32>
    %9 = tpu.matmul %7, %8, %cst_5 {dimension_numbers = #tpu.dot_dimension_numbers<[1], [1], [0], [0], [0, 0, 1, 0], [], []>} : vector<128x32xf32>, vector<128x32xf32>, vector<128x128xf32> -> vector<128x128xf32>
    %c0_6 = arith.constant 0 : index
    %c0_7 = arith.constant 0 : index
    %10 = vector.load %arg4[%c0_6, %c0_7] : memref<128x128xf32, #tpu.memory_space<vmem>>, vector<128x128xf32>
    %11 = arith.addf %9, %10 : vector<128x128xf32>
    %cst_8 = arith.constant dense<0xFF800000> : vector<128xf32>
    %12 = vector.multi_reduction <maximumf>, %11, %cst_8 [1] : vector<128x128xf32> to vector<128xf32>
    %13 = vector.shape_cast %12 : vector<128xf32> to vector<128x1xf32>
    %14 = vector.broadcast %13 : vector<128x1xf32> to vector<128x128xf32>
    %15 = arith.subf %11, %14 : vector<128x128xf32>
    %16 = math.exp %15 : vector<128x128xf32>
    %cst_9 = arith.constant dense<0.000000e+00> : vector<128xf32>
    %17 = vector.multi_reduction <add>, %16, %cst_9 [1] : vector<128x128xf32> to vector<128xf32>
    %18 = vector.shape_cast %17 : vector<128xf32> to vector<128x1xf32>
    %19 = tpu.reciprocal %18 : vector<128x1xf32> -> vector<128x1xf32>
    %20 = vector.broadcast %19 : vector<128x1xf32> to vector<128x128xf32>
    %21 = arith.mulf %16, %20 : vector<128x128xf32>
    %cst_10 = arith.constant dense<0.000000e+00> : vector<128x128xf32>
    %22 = tpu.matmul %21, %6, %cst_10 {dimension_numbers = #tpu.dot_dimension_numbers<[1], [0], [0], [1], [0, 0, 1, 1], [], []>} : vector<128x128xf32>, vector<128x128xf32>, vector<128x128xf32> -> vector<128x128xf32>
    %c0_11 = arith.constant 0 : index
    %c0_12 = arith.constant 0 : index
    %23 = vector.load %arg5[%c0_11, %c0_12] : memref<128x128xf32, #tpu.memory_space<vmem>>, vector<128x128xf32>
    %24 = arith.mulf %22, %23 : vector<128x128xf32>
    %c0_13 = arith.constant 0 : index
    %c0_14 = arith.constant 0 : index
    %25 = vector.load %arg6[%c0_13, %c0_14] : memref<32x128xf32, #tpu.memory_space<vmem>>, vector<32x128xf32>
    %cst_15 = arith.constant dense<0.000000e+00> : vector<32x128xf32>
    %26 = tpu.matmul %25, %24, %cst_15 {dimension_numbers = #tpu.dot_dimension_numbers<[1], [0], [0], [1], [0, 0, 1, 1], [], []>} : vector<32x128xf32>, vector<128x128xf32>, vector<32x128xf32> -> vector<32x128xf32>
    %c0_16 = arith.constant 0 : index
    %c0_17 = arith.constant 0 : index
    %27 = vector.load %arg7[%c0_16, %c0_17] : memref<128x128xf32, #tpu.memory_space<vmem>>, vector<128x128xf32>
    %cst_18 = arith.constant dense<0.000000e+00> : vector<32x128xf32>
    %28 = tpu.matmul %26, %27, %cst_18 {dimension_numbers = #tpu.dot_dimension_numbers<[1], [0], [0], [1], [0, 0, 1, 1], [], []>} : vector<32x128xf32>, vector<128x128xf32>, vector<32x128xf32> -> vector<32x128xf32>
    %c0_19 = arith.constant 0 : index
    %c0_20 = arith.constant 0 : index
    %29 = vector.load %arg8[%c0_19, %c0_20] : memref<1x128xf32, #tpu.memory_space<vmem>>, vector<1x128xf32>
    %30 = vector.broadcast %29 : vector<1x128xf32> to vector<32x128xf32>
    %31 = arith.addf %28, %30 : vector<32x128xf32>
    %c0_21 = arith.constant 0 : index
    %c0_22 = arith.constant 0 : index
    %32 = vector.load %arg9[%c0_21, %c0_22] : memref<32x128xf32, #tpu.memory_space<vmem>>, vector<32x128xf32>
    tpu.vector_store %arg9[%c0_21, %c0_22], %31 {strides = array<i32>} : memref<32x128xf32, #tpu.memory_space<vmem>>, vector<32x128xf32>,
    return
  }
  func.func @transform_0(%arg0: i32) -> (i32, i32) {
    %c0_i32 = arith.constant 0 : i32
    %c0_i32_0 = arith.constant 0 : i32
    return %arg0, %c0_i32 : i32, i32
  }
  func.func @transform_1(%arg0: i32) -> (i32, i32) {
    %c0_i32 = arith.constant 0 : i32
    %c0_i32_0 = arith.constant 0 : i32
    %c0_i32_1 = arith.constant 0 : i32
    return %c0_i32, %c0_i32_0 : i32, i32
  }
  func.func @transform_2(%arg0: i32) -> (i32, i32) {
    %c0_i32 = arith.constant 0 : i32
    %c0_i32_0 = arith.constant 0 : i32
    %c0_i32_1 = arith.constant 0 : i32
    return %c0_i32, %c0_i32_0 : i32, i32
  }
  func.func @transform_3(%arg0: i32) -> (i32, i32) {
    %c0_i32 = arith.constant 0 : i32
    %c0_i32_0 = arith.constant 0 : i32
    %c0_i32_1 = arith.constant 0 : i32
    return %c0_i32, %c0_i32_0 : i32, i32
  }
  func.func @transform_4(%arg0: i32) -> (i32, i32) {
    %c0_i32 = arith.constant 0 : i32
    %c0_i32_0 = arith.constant 0 : i32
    %c0_i32_1 = arith.constant 0 : i32
    return %c0_i32, %c0_i32_0 : i32, i32
  }
  func.func @transform_5(%arg0: i32) -> (i32, i32) {
    %c0_i32 = arith.constant 0 : i32
    %c0_i32_0 = arith.constant 0 : i32
    %c0_i32_1 = arith.constant 0 : i32
    return %c0_i32, %c0_i32_0 : i32, i32
  }
  func.func @transform_6(%arg0: i32) -> (i32, i32) {
    %c0_i32 = arith.constant 0 : i32
    %c0_i32_0 = arith.constant 0 : i32
    %c0_i32_1 = arith.constant 0 : i32
    return %c0_i32, %c0_i32_0 : i32, i32
  }
  func.func @transform_7(%arg0: i32) -> (i32, i32) {
    %c0_i32 = arith.constant 0 : i32
    %c0_i32_0 = arith.constant 0 : i32
    %c0_i32_1 = arith.constant 0 : i32
    return %c0_i32, %c0_i32_0 : i32, i32
  }
  func.func @transform_8(%arg0: i32) -> (i32, i32) {
    %c0_i32 = arith.constant 0 : i32
    %c0_i32_0 = arith.constant 0 : i32
    return %arg0, %c0_i32 : i32, i32
  }
}

</mosaic_0001>

<llo_original>
// kernel: tpu_custom_call.1
$region0: #{tpu_custom_call.1}
  #allocation0 [shape = 'u32[]', space=smem, size = 0x4, offset = 0x4, fixed_abs, tag = 'smem constant byte address 0x4 - core index']
  #allocation1 [shape = 'u32[72,128]{1,0:T(1,128)}', space=vmem, size = 0x9000, scoped, tag = 'internal scratch']
  %s0 = inlined_call_operand.vmem [shape: f32[128,32], index: 0, kind: input, shape index: {}]
  %s1 = inlined_call_operand.hbm [shape: f32[32,192], index: 1, kind: input, shape index: {}]
  %s2 = inlined_call_operand.vmem [shape: f32[1,192], index: 2, kind: input, shape index: {}]
  %s3 = inlined_call_operand.vmem [shape: f32[128,128], index: 3, kind: input, shape index: {}]
  %s4 = inlined_call_operand.hbm [shape: f32[128,128], index: 4, kind: input, shape index: {}]
  %s5 = inlined_call_operand.vmem [shape: f32[32,128], index: 5, kind: input, shape index: {}]
  %s6 = inlined_call_operand.hbm [shape: f32[128,128], index: 6, kind: input, shape index: {}]
  %s7 = inlined_call_operand.vmem [shape: f32[1,128], index: 7, kind: input, shape index: {}]
  %s8 = inlined_call_operand.hbm [shape: f32[32,128], index: 8, kind: output, shape index: {}]
  %s9 = sld [smem:[#allocation0]]
  $region54: #{tpu_custom_call.1} parent=0
    _
  %s11 = ssub.s32 1, %s9
  %s12 = scalar_select 0, %s11, %s9
  $region1: #{tpu_custom_call.1} parent=0
    #allocation2 [shape = 'u8[32768]{0}', space=vmem, size = 0x8000, scoped, tag = 'input window, operand 1, single buffered']
    #allocation3 [shape = 's32[1]{0}', space=sflag, size = 0x4, scoped, tag = 'scoped memory for tpu_custom_call.1']
    #allocation4 [shape = 's32[1]{0}', space=sflag, size = 0x4, scoped, tag = 'scoped memory for tpu_custom_call.1']
    #allocation5 [shape = 'u8[65536]{0}', space=vmem, size = 0x10000, scoped, tag = 'input window, operand 4, single buffered']
    #allocation6 [shape = 's32[1]{0}', space=sflag, size = 0x4, scoped, tag = 'scoped memory for tpu_custom_call.1']
    #allocation7 [shape = 'u8[65536]{0}', space=vmem, size = 0x10000, scoped, tag = 'input window, operand 6, single buffered']
    #allocation8 [shape = 'u8[16384]{0}', space=vmem, size = 0x4000, scoped, tag = 'output window, operand 0, single buffered']
    %13 = vsyncpa [#allocation3], 0
    %14 = vsyncpa [#allocation6], 0
    %15 = vsyncpa [#allocation4], 0
    // Predicated region
    $region2: #{tpu_custom_call.1} parent=1 // pred_check
      _
    $region3: #{tpu_custom_call.1} parent=1 // pred_check_branch
      %17 = sbr.rel (0) target = $region5
    $region4: #{tpu_custom_call.1} parent=1 // pred_region
      _
    $region5: #{tpu_custom_call.1} parent=1 // pred_fallthru
      _
    // Predicated region
    $region6: #{tpu_custom_call.1} parent=1 // pred_check
      _
    $region7: #{tpu_custom_call.1} parent=1 // pred_check_branch
      %19 = sbr.rel (0) target = $region9
    $region8: #{tpu_custom_call.1} parent=1 // pred_region
      %21 = vsyncadd [#allocation3], 0
      %s22 = sshll.u32 %s1, 4
      %s23 = int_to_ptr.hbm [resolvable:$true] %s22
      %s24 = sshll.u32 [#allocation2], 4
      %s25 = int_to_ptr.vmem [resolvable:$true] %s24
      %30 = dma.hbm_to_vmem [thread:$0]  %s23, 1024, %s25, [#allocation3], 256, 256, 16
    $region9: #{tpu_custom_call.1} parent=1 // pred_fallthru
      _
    // Predicated region
    $region10: #{tpu_custom_call.1} parent=1 // pred_check
      _
    $region11: #{tpu_custom_call.1} parent=1 // pred_check_branch
      %32 = sbr.rel (0) target = $region13
    $region12: #{tpu_custom_call.1} parent=1 // pred_region
      _
    $region13: #{tpu_custom_call.1} parent=1 // pred_fallthru
      _
    // Predicated region
    $region14: #{tpu_custom_call.1} parent=1 // pred_check
      _
    $region15: #{tpu_custom_call.1} parent=1 // pred_check_branch
      %34 = sbr.rel (0) target = $region17
    $region16: #{tpu_custom_call.1} parent=1 // pred_region
      _
    $region17: #{tpu_custom_call.1} parent=1 // pred_fallthru
      _
    // Predicated region
    $region18: #{tpu_custom_call.1} parent=1 // pred_check
      _
    $region19: #{tpu_custom_call.1} parent=1 // pred_check_branch
      %36 = sbr.rel (0) target = $region21
    $region20: #{tpu_custom_call.1} parent=1 // pred_region
      %38 = vsyncadd [#allocation6], 0
      %s39 = sshll.u32 %s4, 4
      %s40 = int_to_ptr.hbm [resolvable:$true] %s39
      %s41 = sshll.u32 [#allocation5], 4
      %s42 = int_to_ptr.vmem [resolvable:$true] %s41
      %47 = dma.hbm_to_vmem [thread:$0]  %s40, 2048, %s42, [#allocation6], 128, 128, 8
    $region21: #{tpu_custom_call.1} parent=1 // pred_fallthru
      _
    // Predicated region
    $region22: #{tpu_custom_call.1} parent=1 // pred_check
      _
    $region23: #{tpu_custom_call.1} parent=1 // pred_check_branch
      %49 = sbr.rel (0) target = $region25
    $region24: #{tpu_custom_call.1} parent=1 // pred_region
      _
    $region25: #{tpu_custom_call.1} parent=1 // pred_fallthru
      _
    // Predicated region
    $region26: #{tpu_custom_call.1} parent=1 // pred_check
      _
    $region27: #{tpu_custom_call.1} parent=1 // pred_check_branch
      %51 = sbr.rel (0) target = $region29
    $region28: #{tpu_custom_call.1} parent=1 // pred_region
      %53 = vsyncadd [#allocation6], 0
      %s54 = sshll.u32 %s6, 4
      %s55 = int_to_ptr.hbm [resolvable:$true] %s54
      %s56 = sshll.u32 [#allocation7], 4
      %s57 = int_to_ptr.vmem [resolvable:$true] %s56
      %62 = dma.hbm_to_vmem [thread:$0]  %s55, 2048, %s57, [#allocation6], 128, 128, 8
    $region29: #{tpu_custom_call.1} parent=1 // pred_fallthru
      _
    // Predicated region
    $region30: #{tpu_custom_call.1} parent=1 // pred_check
      _
    $region31: #{tpu_custom_call.1} parent=1 // pred_check_branch
      %64 = sbr.rel (0) target = $region33
    $region32: #{tpu_custom_call.1} parent=1 // pred_region
      _
    $region33: #{tpu_custom_call.1} parent=1 // pred_fallthru
      _
    // Predicated region
    $region34: #{tpu_custom_call.1} parent=1 // pred_check
      _
    $region35: #{tpu_custom_call.1} parent=1 // pred_check_branch
      %66 = sbr.rel (0) target = $region37
    $region36: #{tpu_custom_call.1} parent=1 // pred_region
      %68 = dma.done [#allocation3], 1024
    $region37: #{tpu_custom_call.1} parent=1 // pred_fallthru
      _
    // Predicated region
    $region38: #{tpu_custom_call.1} parent=1 // pred_check
      _
    $region39: #{tpu_custom_call.1} parent=1 // pred_check_branch
      %70 = sbr.rel (0) target = $region41
    $region40: #{tpu_custom_call.1} parent=1 // pred_region
      %72 = dma.done [#allocation6], 2048
    $region41: #{tpu_custom_call.1} parent=1 // pred_fallthru
      _
    // Predicated region
    $region42: #{tpu_custom_call.1} parent=1 // pred_check
      _
    $region43: #{tpu_custom_call.1} parent=1 // pred_check_branch
      %74 = sbr.rel (0) target = $region45
    $region44: #{tpu_custom_call.1} parent=1 // pred_region
      %76 = dma.done [#allocation6], 2048
    $region45: #{tpu_custom_call.1} parent=1 // pred_fallthru
      _
    %v77 = vld [vmem:[%s0] sm:$0xff]
    %v78 = vld [vmem:[%s0 + $0x8] sm:$0xff]
    %v79 = vld [vmem:[%s0 + $0x10] sm:$0xff]
    %v80 = vld [vmem:[%s0 + $0x18] sm:$0xff]
    %v81 = vld [vmem:[%s0 + $0x20] sm:$0xff]
    %v82 = vld [vmem:[%s0 + $0x28] sm:$0xff]
    %v83 = vld [vmem:[%s0 + $0x30] sm:$0xff]
    %v84 = vld [vmem:[%s0 + $0x38] sm:$0xff]
    %v85 = vld [vmem:[%s0 + $0x40] sm:$0xff]
    %v86 = vld [vmem:[%s0 + $0x48] sm:$0xff]
    %v87 = vld [vmem:[%s0 + $0x50] sm:$0xff]
    %v88 = vld [vmem:[%s0 + $0x58] sm:$0xff]
    %v89 = vld [vmem:[%s0 + $0x60] sm:$0xff]
    %v90 = vld [vmem:[%s0 + $0x68] sm:$0xff]
    %v91 = vld [vmem:[%s0 + $0x70] sm:$0xff]
    %v92 = vld [vmem:[%s0 + $0x78] sm:$0xff]
    %v93 = vld [vmem:[#allocation2] sm:$0xff]
    %v94 = vld [vmem:[#allocation2 + $0x8] sm:$0xff]
    %v95 = vld [vmem:[#allocation2 + $0x10] sm:$0xff]
    %v96 = vld [vmem:[#allocation2 + $0x18] sm:$0xff]
    %v97 = vld [vmem:[#allocation2 + $0x20] sm:$0xff]
    %v98 = vld [vmem:[#allocation2 + $0x28] sm:$0xff]
    %v99 = vld [vmem:[#allocation2 + $0x30] sm:$0xff]
    %v100 = vld [vmem:[#allocation2 + $0x38] sm:$0xff]
    %v101 = vld [vmem:[%s2] sm:$0x3]
    %v103 = vperm.slane %v101, 0
    %v104 = vperm.slane %v101, 1
    %vm107 = vcmask 261120
    %v109 = vsel %vm107, %v77, 0
    %v112 = vsel %vm107, %v78, 0
    %v115 = vsel %vm107, %v79, 0
    %v118 = vsel %vm107, %v80, 0
    %v121 = vsel %vm107, %v81, 0
    %v124 = vsel %vm107, %v82, 0
    %v127 = vsel %vm107, %v83, 0
    %v130 = vsel %vm107, %v84, 0
    %v133 = vsel %vm107, %v85, 0
    %v136 = vsel %vm107, %v86, 0
    %v139 = vsel %vm107, %v87, 0
    %v142 = vsel %vm107, %v88, 0
    %v145 = vsel %vm107, %v89, 0
    %v148 = vsel %vm107, %v90, 0
    %v151 = vsel %vm107, %v91, 0
    %v154 = vsel %vm107, %v92, 0
    %156 = vmatpush.msra.mxu0 0.0
    %157 = vmatpush.msra.mxu0 0.0
    %158 = vmatpush.msra.mxu0 0.0
    %159 = vmatpush.msra.mxu0 0.0
    %160 = vmatpush.msra.mxu0 0.0
    %161 = vmatpush.msra.mxu0 0.0
    %162 = vmatpush.msra.mxu0 0.0
    %163 = vmatpush.msra.mxu0 0.0
    %164 = vmatpush.msra.mxu0 0.0
    %165 = vmatpush.msra.mxu0 0.0
    %166 = vmatpush.msra.mxu0 0.0
    %167 = vmatpush.msra.mxu0 0.0
    %168 = vmatpush.msra.mxu0 %v99
    %169 = vmatpush.msra.mxu0 %v97
    %170 = vmatpush.msra.mxu0 %v95
    %171 = vmatpush.msra.mxu0 %v93
    %172 = vmatmul.f32.gmra.mxu0 %v109
    %v173 = vpop.f32.mrf.mxu0
    %v174 = vadd.f32 %v103, %v173
    %175 = vmatmul.f32.gmra.mxu0 %v112
    %v176 = vpop.f32.mrf.mxu0
    %v177 = vadd.f32 %v103, %v176
    %178 = vmatmul.f32.gmra.mxu0 %v115
    %v179 = vpop.f32.mrf.mxu0
    %v180 = vadd.f32 %v103, %v179
    %181 = vmatmul.f32.gmra.mxu0 %v118
    %v182 = vpop.f32.mrf.mxu0
    %v183 = vadd.f32 %v103, %v182
    %184 = vmatmul.f32.gmra.mxu0 %v121
    %v185 = vpop.f32.mrf.mxu0
    %v186 = vadd.f32 %v103, %v185
    %187 = vmatmul.f32.gmra.mxu0 %v124
    %v188 = vpop.f32.mrf.mxu0
    %v189 = vadd.f32 %v103, %v188
    %190 = vmatmul.f32.gmra.mxu0 %v127
    %v191 = vpop.f32.mrf.mxu0
    %v192 = vadd.f32 %v103, %v191
    %193 = vmatmul.f32.gmra.mxu0 %v130
    %v194 = vpop.f32.mrf.mxu0
    %v195 = vadd.f32 %v103, %v194
    %196 = vmatmul.f32.gmra.mxu0 %v133
    %v197 = vpop.f32.mrf.mxu0
    %v198 = vadd.f32 %v103, %v197
    %199 = vmatmul.f32.gmra.mxu0 %v136
    %v200 = vpop.f32.mrf.mxu0
    %v201 = vadd.f32 %v103, %v200
    %202 = vmatmul.f32.gmra.mxu0 %v139
    %v203 = vpop.f32.mrf.mxu0
    %v204 = vadd.f32 %v103, %v203
    %205 = vmatmul.f32.gmra.mxu0 %v142
    %v206 = vpop.f32.mrf.mxu0
    %v207 = vadd.f32 %v103, %v206
    %208 = vmatmul.f32.gmra.mxu0 %v145
    %v209 = vpop.f32.mrf.mxu0
    %v210 = vadd.f32 %v103, %v209
    %211 = vmatmul.f32.gmra.mxu0 %v148
    %v212 = vpop.f32.mrf.mxu0
    %v213 = vadd.f32 %v103, %v212
    %214 = vmatmul.f32.gmra.mxu0 %v151
    %v215 = vpop.f32.mrf.mxu0
    %v216 = vadd.f32 %v103, %v215
    %217 = vmatmul.f32.gmra.mxu0 %v154
    %v218 = vpop.f32.mrf.mxu0
    %v219 = vadd.f32 %v103, %v218
    %220 = vdwg.mxu0
    %221 = vmatpush.msra.mxu0 0.0
    %222 = vmatpush.msra.mxu0 0.0
    %223 = vmatpush.msra.mxu0 0.0
    %224 = vmatpush.msra.mxu0 0.0
    %225 = vmatpush.msra.mxu0 0.0
    %226 = vmatpush.msra.mxu0 0.0
    %227 = vmatpush.msra.mxu0 0.0
    %228 = vmatpush.msra.mxu0 0.0
    %229 = vmatpush.msra.mxu0 0.0
    %230 = vmatpush.msra.mxu0 0.0
    %231 = vmatpush.msra.mxu0 0.0
    %232 = vmatpush.msra.mxu0 0.0
    %233 = vmatpush.msra.mxu0 %v100
    %234 = vmatpush.msra.mxu0 %v98
    %235 = vmatpush.msra.mxu0 %v96
    %236 = vmatpush.msra.mxu0 %v94
    %237 = vmatmul.f32.gmra.mxu0 %v109
    %v238 = vpop.f32.mrf.mxu0
    %v239 = vadd.f32 %v104, %v238
    %240 = vmatmul.f32.gmra.mxu0 %v112
    %v241 = vpop.f32.mrf.mxu0
    %v242 = vadd.f32 %v104, %v241
    %243 = vmatmul.f32.gmra.mxu0 %v115
    %v244 = vpop.f32.mrf.mxu0
    %v245 = vadd.f32 %v104, %v244
    %246 = vmatmul.f32.gmra.mxu0 %v118
    %v247 = vpop.f32.mrf.mxu0
    %v248 = vadd.f32 %v104, %v247
    %249 = vmatmul.f32.gmra.mxu0 %v121
    %v250 = vpop.f32.mrf.mxu0
    %v251 = vadd.f32 %v104, %v250
    %252 = vmatmul.f32.gmra.mxu0 %v124
    %v253 = vpop.f32.mrf.mxu0
    %v254 = vadd.f32 %v104, %v253
    %255 = vmatmul.f32.gmra.mxu0 %v127
    %v256 = vpop.f32.mrf.mxu0
    %v257 = vadd.f32 %v104, %v256
    %258 = vmatmul.f32.gmra.mxu0 %v130
    %v259 = vpop.f32.mrf.mxu0
    %v260 = vadd.f32 %v104, %v259
    %261 = vmatmul.f32.gmra.mxu0 %v133
    %v262 = vpop.f32.mrf.mxu0
    %v263 = vadd.f32 %v104, %v262
    %264 = vmatmul.f32.gmra.mxu0 %v136
    %v265 = vpop.f32.mrf.mxu0
    %v266 = vadd.f32 %v104, %v265
    %267 = vmatmul.f32.gmra.mxu0 %v139
    %v268 = vpop.f32.mrf.mxu0
    %v269 = vadd.f32 %v104, %v268
    %270 = vmatmul.f32.gmra.mxu0 %v142
    %v271 = vpop.f32.mrf.mxu0
    %v272 = vadd.f32 %v104, %v271
    %273 = vmatmul.f32.gmra.mxu0 %v145
    %v274 = vpop.f32.mrf.mxu0
    %v275 = vadd.f32 %v104, %v274
    %276 = vmatmul.f32.gmra.mxu0 %v148
    %v277 = vpop.f32.mrf.mxu0
    %v278 = vadd.f32 %v104, %v277
    %279 = vmatmul.f32.gmra.mxu0 %v151
    %v280 = vpop.f32.mrf.mxu0
    %v281 = vadd.f32 %v104, %v280
    %282 = vmatmul.f32.gmra.mxu0 %v154
    %v283 = vpop.f32.mrf.mxu0
    %v284 = vadd.f32 %v104, %v283
    %285 = vdwg.mxu0
    %v286 = vld [vmem:[%s3] sm:$0xff]
    %v287 = vld [vmem:[%s3 + $0x8] sm:$0xff]
    %v288 = vld [vmem:[%s3 + $0x10] sm:$0xff]
    %v289 = vld [vmem:[%s3 + $0x18] sm:$0xff]
    %v290 = vld [vmem:[%s3 + $0x20] sm:$0xff]
    %v291 = vld [vmem:[%s3 + $0x28] sm:$0xff]
    %v292 = vld [vmem:[%s3 + $0x30] sm:$0xff]
    %v293 = vld [vmem:[%s3 + $0x38] sm:$0xff]
    %v294 = vld [vmem:[%s3 + $0x40] sm:$0xff]
    %v295 = vld [vmem:[%s3 + $0x48] sm:$0xff]
    %v296 = vld [vmem:[%s3 + $0x50] sm:$0xff]
    %v297 = vld [vmem:[%s3 + $0x58] sm:$0xff]
    %v298 = vld [vmem:[%s3 + $0x60] sm:$0xff]
    %v299 = vld [vmem:[%s3 + $0x68] sm:$0xff]
    %v300 = vld [vmem:[%s3 + $0x70] sm:$0xff]
    %v301 = vld [vmem:[%s3 + $0x78] sm:$0xff]
    %318 = vrot.lane.b32.xlu0 %v239, 96
    %v319 = vpop.permute.xlu0 %318
    %320 = vrot.lane.b32.xlu0 %v242, 96
    %v321 = vpop.permute.xlu0 %320
    %322 = vrot.lane.b32.xlu0 %v245, 96
    %v323 = vpop.permute.xlu0 %322
    %324 = vrot.lane.b32.xlu0 %v248, 96
    %v325 = vpop.permute.xlu0 %324
    %326 = vrot.lane.b32.xlu0 %v251, 96
    %v327 = vpop.permute.xlu0 %326
    %328 = vrot.lane.b32.xlu0 %v254, 96
    %v329 = vpop.permute.xlu0 %328
    %330 = vrot.lane.b32.xlu0 %v257, 96
    %v331 = vpop.permute.xlu0 %330
    %332 = vrot.lane.b32.xlu0 %v260, 96
    %v333 = vpop.permute.xlu0 %332
    %334 = vrot.lane.b32.xlu0 %v263, 96
    %v335 = vpop.permute.xlu0 %334
    %336 = vrot.lane.b32.xlu0 %v266, 96
    %v337 = vpop.permute.xlu0 %336
    %338 = vrot.lane.b32.xlu0 %v269, 96
    %v339 = vpop.permute.xlu0 %338
    %340 = vrot.lane.b32.xlu0 %v272, 96
    %v341 = vpop.permute.xlu0 %340
    %342 = vrot.lane.b32.xlu0 %v275, 96
    %v343 = vpop.permute.xlu0 %342
    %344 = vrot.lane.b32.xlu0 %v278, 96
    %v345 = vpop.permute.xlu0 %344
    %346 = vrot.lane.b32.xlu0 %v281, 96
    %v347 = vpop.permute.xlu0 %346
    %348 = vrot.lane.b32.xlu0 %v284, 96
    %v349 = vpop.permute.xlu0 %348
    %v350 = vsel %vm107, %v239, 0
    %v352 = vsel %vm107, %v242, 0
    %v354 = vsel %vm107, %v245, 0
    %v356 = vsel %vm107, %v248, 0
    %v358 = vsel %vm107, %v251, 0
    %v360 = vsel %vm107, %v254, 0
    %v362 = vsel %vm107, %v257, 0
    %v364 = vsel %vm107, %v260, 0
    %v366 = vsel %vm107, %v263, 0
    %v368 = vsel %vm107, %v266, 0
    %v370 = vsel %vm107, %v269, 0
    %v372 = vsel %vm107, %v272, 0
    %v374 = vsel %vm107, %v275, 0
    %v376 = vsel %vm107, %v278, 0
    %v378 = vsel %vm107, %v281, 0
    %v380 = vsel %vm107, %v284, 0
    %v382 = vsel %vm107, %v319, 0
    %v384 = vsel %vm107, %v321, 0
    %v386 = vsel %vm107, %v323, 0
    %v388 = vsel %vm107, %v325, 0
    %v390 = vsel %vm107, %v327, 0
    %v392 = vsel %vm107, %v329, 0
    %v394 = vsel %vm107, %v331, 0
    %v396 = vsel %vm107, %v333, 0
    %v398 = vsel %vm107, %v335, 0
    %v400 = vsel %vm107, %v337, 0
    %v402 = vsel %vm107, %v339, 0
    %v404 = vsel %vm107, %v341, 0
    %v406 = vsel %vm107, %v343, 0
    %v408 = vsel %vm107, %v345, 0
    %v410 = vsel %vm107, %v347, 0
    %v412 = vsel %vm107, %v349, 0
    %414 = vmatpush.xpose.msra.mxu0 %v412
    %415 = vmatpush.xpose.msra.mxu0 %v410
    %416 = vmatpush.xpose.msra.mxu0 %v408
    %417 = vmatpush.xpose.msra.mxu0 %v406
    %418 = vmatpush.xpose.msra.mxu0 %v404
    %419 = vmatpush.xpose.msra.mxu0 %v402
    %420 = vmatpush.xpose.msra.mxu0 %v400
    %421 = vmatpush.xpose.msra.mxu0 %v398
    %422 = vmatpush.xpose.msra.mxu0 %v396
    %423 = vmatpush.xpose.msra.mxu0 %v394
    %424 = vmatpush.xpose.msra.mxu0 %v392
    %425 = vmatpush.xpose.msra.mxu0 %v390
    %426 = vmatpush.xpose.msra.mxu0 %v388
    %427 = vmatpush.xpose.msra.mxu0 %v386
    %428 = vmatpush.xpose.msra.mxu0 %v384
    %429 = vmatpush.xpose.msra.mxu0 %v382
    %430 = vmatmul.f32.gmra.mxu0 %v350
    %v431 = vpop.f32.mrf.mxu0
    %v432 = vadd.f32 %v286, %v431
    %433 = vmatmul.f32.gmra.mxu0 %v352
    %v434 = vpop.f32.mrf.mxu0
    %v435 = vadd.f32 %v287, %v434
    %436 = vmatmul.f32.gmra.mxu0 %v354
    %v437 = vpop.f32.mrf.mxu0
    %v438 = vadd.f32 %v288, %v437
    %439 = vmatmul.f32.gmra.mxu0 %v356
    %v440 = vpop.f32.mrf.mxu0
    %v441 = vadd.f32 %v289, %v440
    %442 = vmatmul.f32.gmra.mxu0 %v358
    %v443 = vpop.f32.mrf.mxu0
    %v444 = vadd.f32 %v290, %v443
    %445 = vmatmul.f32.gmra.mxu0 %v360
    %v446 = vpop.f32.mrf.mxu0
    %v447 = vadd.f32 %v291, %v446
    %448 = vmatmul.f32.gmra.mxu0 %v362
    %v449 = vpop.f32.mrf.mxu0
    %v450 = vadd.f32 %v292, %v449
    %451 = vmatmul.f32.gmra.mxu0 %v364
    %v452 = vpop.f32.mrf.mxu0
    %v453 = vadd.f32 %v293, %v452
    %454 = vmatmul.f32.gmra.mxu0 %v366
    %v455 = vpop.f32.mrf.mxu0
    %v456 = vadd.f32 %v294, %v455
    %457 = vmatmul.f32.gmra.mxu0 %v368
    %v458 = vpop.f32.mrf.mxu0
    %v459 = vadd.f32 %v295, %v458
    %460 = vmatmul.f32.gmra.mxu0 %v370
    %v461 = vpop.f32.mrf.mxu0
    %v462 = vadd.f32 %v296, %v461
    %463 = vmatmul.f32.gmra.mxu0 %v372
    %v464 = vpop.f32.mrf.mxu0
    %v465 = vadd.f32 %v297, %v464
    %466 = vmatmul.f32.gmra.mxu0 %v374
    %v467 = vpop.f32.mrf.mxu0
    %v468 = vadd.f32 %v298, %v467
    %469 = vmatmul.f32.gmra.mxu0 %v376
    %v470 = vpop.f32.mrf.mxu0
    %v471 = vadd.f32 %v299, %v470
    %472 = vmatmul.f32.gmra.mxu0 %v378
    %v473 = vpop.f32.mrf.mxu0
    %v474 = vadd.f32 %v300, %v473
    %475 = vmatmul.f32.gmra.mxu0 %v380
    %v476 = vpop.f32.mrf.mxu0
    %v477 = vadd.f32 %v301, %v476
    %478 = vdwg.mxu0
    %479 = vmax.xlane.f32.xlu0 %v432
    %v480 = vpop.xlane.xlu0 %479
    %481 = vmax.xlane.f32.xlu0 %v435
    %v482 = vpop.xlane.xlu0 %481
    %483 = vmax.xlane.f32.xlu0 %v438
    %v484 = vpop.xlane.xlu0 %483
    %485 = vmax.xlane.f32.xlu0 %v441
    %v486 = vpop.xlane.xlu0 %485
    %487 = vmax.xlane.f32.xlu0 %v444
    %v488 = vpop.xlane.xlu0 %487
    %489 = vmax.xlane.f32.xlu0 %v447
    %v490 = vpop.xlane.xlu0 %489
    %491 = vmax.xlane.f32.xlu0 %v450
    %v492 = vpop.xlane.xlu0 %491
    %493 = vmax.xlane.f32.xlu0 %v453
    %v494 = vpop.xlane.xlu0 %493
    %495 = vmax.xlane.f32.xlu0 %v456
    %v496 = vpop.xlane.xlu0 %495
    %497 = vmax.xlane.f32.xlu0 %v459
    %v498 = vpop.xlane.xlu0 %497
    %499 = vmax.xlane.f32.xlu0 %v462
    %v500 = vpop.xlane.xlu0 %499
    %501 = vmax.xlane.f32.xlu0 %v465
    %v502 = vpop.xlane.xlu0 %501
    %503 = vmax.xlane.f32.xlu0 %v468
    %v504 = vpop.xlane.xlu0 %503
    %505 = vmax.xlane.f32.xlu0 %v471
    %v506 = vpop.xlane.xlu0 %505
    %507 = vmax.xlane.f32.xlu0 %v474
    %v508 = vpop.xlane.xlu0 %507
    %509 = vmax.xlane.f32.xlu0 %v477
    %v510 = vpop.xlane.xlu0 %509
    %v511 = vsub.f32 %v432, %v480
    %v512 = vsub.f32 %v435, %v482
    %v513 = vsub.f32 %v438, %v484
    %v514 = vsub.f32 %v441, %v486
    %v515 = vsub.f32 %v444, %v488
    %v516 = vsub.f32 %v447, %v490
    %v517 = vsub.f32 %v450, %v492
    %v518 = vsub.f32 %v453, %v494
    %v519 = vsub.f32 %v456, %v496
    %v520 = vsub.f32 %v459, %v498
    %v521 = vsub.f32 %v462, %v500
    %v522 = vsub.f32 %v465, %v502
    %v523 = vsub.f32 %v468, %v504
    %v524 = vsub.f32 %v471, %v506
    %v525 = vsub.f32 %v474, %v508
    %v526 = vsub.f32 %v477, %v510
    %v527 = vmul.f32 %v511, 1.442695
    %v528 = vpow.pop %v527
    %v529 = vmul.f32 %v512, 1.442695
    %v530 = vpow.pop %v529
    %v531 = vmul.f32 %v513, 1.442695
    %v532 = vpow.pop %v531
    %v533 = vmul.f32 %v514, 1.442695
    %v534 = vpow.pop %v533
    %v535 = vmul.f32 %v515, 1.442695
    %v536 = vpow.pop %v535
    %v537 = vmul.f32 %v516, 1.442695
    %v538 = vpow.pop %v537
    %v539 = vmul.f32 %v517, 1.442695
    %v540 = vpow.pop %v539
    %v541 = vmul.f32 %v518, 1.442695
    %v542 = vpow.pop %v541
    %v543 = vmul.f32 %v519, 1.442695
    %v544 = vpow.pop %v543
    %v545 = vmul.f32 %v520, 1.442695
    %v546 = vpow.pop %v545
    %v547 = vmul.f32 %v521, 1.442695
    %v548 = vpow.pop %v547
    %v549 = vmul.f32 %v522, 1.442695
    %v550 = vpow.pop %v549
    %v551 = vmul.f32 %v523, 1.442695
    %v552 = vpow.pop %v551
    %v553 = vmul.f32 %v524, 1.442695
    %v554 = vpow.pop %v553
    %v555 = vmul.f32 %v525, 1.442695
    %v556 = vpow.pop %v555
    %v557 = vmul.f32 %v526, 1.442695
    %v558 = vpow.pop %v557
    %559 = vadd.xlane.f32.xlu0 %v528
    %v560 = vpop.xlane.xlu0 %559
    %561 = vadd.xlane.f32.xlu0 %v530
    %v562 = vpop.xlane.xlu0 %561
    %563 = vadd.xlane.f32.xlu0 %v532
    %v564 = vpop.xlane.xlu0 %563
    %565 = vadd.xlane.f32.xlu0 %v534
    %v566 = vpop.xlane.xlu0 %565
    %567 = vadd.xlane.f32.xlu0 %v536
    %v568 = vpop.xlane.xlu0 %567
    %569 = vadd.xlane.f32.xlu0 %v538
    %v570 = vpop.xlane.xlu0 %569
    %571 = vadd.xlane.f32.xlu0 %v540
    %v572 = vpop.xlane.xlu0 %571
    %573 = vadd.xlane.f32.xlu0 %v542
    %v574 = vpop.xlane.xlu0 %573
    %575 = vadd.xlane.f32.xlu0 %v544
    %v576 = vpop.xlane.xlu0 %575
    %577 = vadd.xlane.f32.xlu0 %v546
    %v578 = vpop.xlane.xlu0 %577
    %579 = vadd.xlane.f32.xlu0 %v548
    %v580 = vpop.xlane.xlu0 %579
    %581 = vadd.xlane.f32.xlu0 %v550
    %v582 = vpop.xlane.xlu0 %581
    %583 = vadd.xlane.f32.xlu0 %v552
    %v584 = vpop.xlane.xlu0 %583
    %585 = vadd.xlane.f32.xlu0 %v554
    %v586 = vpop.xlane.xlu0 %585
    %587 = vadd.xlane.f32.xlu0 %v556
    %v588 = vpop.xlane.xlu0 %587
    %589 = vadd.xlane.f32.xlu0 %v558
    %v590 = vpop.xlane.xlu0 %589
    %v591 = vrcp.pop %v560
    %v592 = vmul.f32 %v560, %v591
    %v593 = vsub.f32 1.0, %v592
    %v594 = vmul.f32 %v591, %v593
    %v595 = vadd.f32 %v591, %v594
    %vm596 = vweird.f32 %v560
    %vm597 = vweird.f32 %v591
    %vm598 = vmor %vm596, %vm597
    %v599 = vsel %vm598, %v591, %v595
    %v600 = vand.u32 2147483647, %v560
    %vm601 = vcmp.eq.f32.partialorder %v600, 8.507059e+37
    %v602 = vand.u32 %v560, 2147483648
    %v603 = vor.u32 1.1754944e-38, %v602
    %v604 = vsel %vm601, %v603, %v599
    %v605 = vrcp.pop %v562
    %v606 = vmul.f32 %v562, %v605
    %v607 = vsub.f32 1.0, %v606
    %v608 = vmul.f32 %v605, %v607
    %v609 = vadd.f32 %v605, %v608
    %vm610 = vweird.f32 %v562
    %vm611 = vweird.f32 %v605
    %vm612 = vmor %vm610, %vm611
    %v613 = vsel %vm612, %v605, %v609
    %v614 = vand.u32 2147483647, %v562
    %vm615 = vcmp.eq.f32.partialorder %v614, 8.507059e+37
    %v616 = vand.u32 %v562, 2147483648
    %v617 = vor.u32 1.1754944e-38, %v616
    %v618 = vsel %vm615, %v617, %v613
    %v619 = vrcp.pop %v564
    %v620 = vmul.f32 %v564, %v619
    %v621 = vsub.f32 1.0, %v620
    %v622 = vmul.f32 %v619, %v621
    %v623 = vadd.f32 %v619, %v622
    %vm624 = vweird.f32 %v564
    %vm625 = vweird.f32 %v619
    %vm626 = vmor %vm624, %vm625
    %v627 = vsel %vm626, %v619, %v623
    %v628 = vand.u32 2147483647, %v564
    %vm629 = vcmp.eq.f32.partialorder %v628, 8.507059e+37
    %v630 = vand.u32 %v564, 2147483648
    %v631 = vor.u32 1.1754944e-38, %v630
    %v632 = vsel %vm629, %v631, %v627
    %v633 = vrcp.pop %v566
    %v634 = vmul.f32 %v566, %v633
    %v635 = vsub.f32 1.0, %v634
    %v636 = vmul.f32 %v633, %v635
    %v637 = vadd.f32 %v633, %v636
    %vm638 = vweird.f32 %v566
    %vm639 = vweird.f32 %v633
    %vm640 = vmor %vm638, %vm639
    %v641 = vsel %vm640, %v633, %v637
    %v642 = vand.u32 2147483647, %v566
    %vm643 = vcmp.eq.f32.partialorder %v642, 8.507059e+37
    %v644 = vand.u32 %v566, 2147483648
    %v645 = vor.u32 1.1754944e-38, %v644
    %v646 = vsel %vm643, %v645, %v641
    %v647 = vrcp.pop %v568
    %v648 = vmul.f32 %v568, %v647
    %v649 = vsub.f32 1.0, %v648
    %v650 = vmul.f32 %v647, %v649
    %v651 = vadd.f32 %v647, %v650
    %vm652 = vweird.f32 %v568
    %vm653 = vweird.f32 %v647
    %vm654 = vmor %vm652, %vm653
    %v655 = vsel %vm654, %v647, %v651
    %v656 = vand.u32 2147483647, %v568
    %vm657 = vcmp.eq.f32.partialorder %v656, 8.507059e+37
    %v658 = vand.u32 %v568, 2147483648
    %v659 = vor.u32 1.1754944e-38, %v658
    %v660 = vsel %vm657, %v659, %v655
    %v661 = vrcp.pop %v570
    %v662 = vmul.f32 %v570, %v661
    %v663 = vsub.f32 1.0, %v662
    %v664 = vmul.f32 %v661, %v663
    %v665 = vadd.f32 %v661, %v664
    %vm666 = vweird.f32 %v570
    %vm667 = vweird.f32 %v661
    %vm668 = vmor %vm666, %vm667
    %v669 = vsel %vm668, %v661, %v665
    %v670 = vand.u32 2147483647, %v570
    %vm671 = vcmp.eq.f32.partialorder %v670, 8.507059e+37
    %v672 = vand.u32 %v570, 2147483648
    %v673 = vor.u32 1.1754944e-38, %v672
    %v674 = vsel %vm671, %v673, %v669
    %v675 = vrcp.pop %v572
    %v676 = vmul.f32 %v572, %v675
    %v677 = vsub.f32 1.0, %v676
    %v678 = vmul.f32 %v675, %v677
    %v679 = vadd.f32 %v675, %v678
    %vm680 = vweird.f32 %v572
    %vm681 = vweird.f32 %v675
    %vm682 = vmor %vm680, %vm681
    %v683 = vsel %vm682, %v675, %v679
    %v684 = vand.u32 2147483647, %v572
    %vm685 = vcmp.eq.f32.partialorder %v684, 8.507059e+37
    %v686 = vand.u32 %v572, 2147483648
    %v687 = vor.u32 1.1754944e-38, %v686
    %v688 = vsel %vm685, %v687, %v683
    %v689 = vrcp.pop %v574
    %v690 = vmul.f32 %v574, %v689
    %v691 = vsub.f32 1.0, %v690
    %v692 = vmul.f32 %v689, %v691
    %v693 = vadd.f32 %v689, %v692
    %vm694 = vweird.f32 %v574
    %vm695 = vweird.f32 %v689
    %vm696 = vmor %vm694, %vm695
    %v697 = vsel %vm696, %v689, %v693
    %v698 = vand.u32 2147483647, %v574
    %vm699 = vcmp.eq.f32.partialorder %v698, 8.507059e+37
    %v700 = vand.u32 %v574, 2147483648
    %v701 = vor.u32 1.1754944e-38, %v700
    %v702 = vsel %vm699, %v701, %v697
    %v703 = vrcp.pop %v576
    %v704 = vmul.f32 %v576, %v703
    %v705 = vsub.f32 1.0, %v704
    %v706 = vmul.f32 %v703, %v705
    %v707 = vadd.f32 %v703, %v706
    %vm708 = vweird.f32 %v576
    %vm709 = vweird.f32 %v703
    %vm710 = vmor %vm708, %vm709
    %v711 = vsel %vm710, %v703, %v707
    %v712 = vand.u32 2147483647, %v576
    %vm713 = vcmp.eq.f32.partialorder %v712, 8.507059e+37
    %v714 = vand.u32 %v576, 2147483648
    %v715 = vor.u32 1.1754944e-38, %v714
    %v716 = vsel %vm713, %v715, %v711
    %v717 = vrcp.pop %v578
    %v718 = vmul.f32 %v578, %v717
    %v719 = vsub.f32 1.0, %v718
    %v720 = vmul.f32 %v717, %v719
    %v721 = vadd.f32 %v717, %v720
    %vm722 = vweird.f32 %v578
    %vm723 = vweird.f32 %v717
    %vm724 = vmor %vm722, %vm723
    %v725 = vsel %vm724, %v717, %v721
    %v726 = vand.u32 2147483647, %v578
    %vm727 = vcmp.eq.f32.partialorder %v726, 8.507059e+37
    %v728 = vand.u32 %v578, 2147483648
    %v729 = vor.u32 1.1754944e-38, %v728
    %v730 = vsel %vm727, %v729, %v725
    %v731 = vrcp.pop %v580
    %v732 = vmul.f32 %v580, %v731
    %v733 = vsub.f32 1.0, %v732
    %v734 = vmul.f32 %v731, %v733
    %v735 = vadd.f32 %v731, %v734
    %vm736 = vweird.f32 %v580
    %vm737 = vweird.f32 %v731
    %vm738 = vmor %vm736, %vm737
    %v739 = vsel %vm738, %v731, %v735
    %v740 = vand.u32 2147483647, %v580
    %vm741 = vcmp.eq.f32.partialorder %v740, 8.507059e+37
    %v742 = vand.u32 %v580, 2147483648
    %v743 = vor.u32 1.1754944e-38, %v742
    %v744 = vsel %vm741, %v743, %v739
    %v745 = vrcp.pop %v582
    %v746 = vmul.f32 %v582, %v745
    %v747 = vsub.f32 1.0, %v746
    %v748 = vmul.f32 %v745, %v747
    %v749 = vadd.f32 %v745, %v748
    %vm750 = vweird.f32 %v582
    %vm751 = vweird.f32 %v745
    %vm752 = vmor %vm750, %vm751
    %v753 = vsel %vm752, %v745, %v749
    %v754 = vand.u32 2147483647, %v582
    %vm755 = vcmp.eq.f32.partialorder %v754, 8.507059e+37
    %v756 = vand.u32 %v582, 2147483648
    %v757 = vor.u32 1.1754944e-38, %v756
    %v758 = vsel %vm755, %v757, %v753
    %v759 = vrcp.pop %v584
    %v760 = vmul.f32 %v584, %v759
    %v761 = vsub.f32 1.0, %v760
    %v762 = vmul.f32 %v759, %v761
    %v763 = vadd.f32 %v759, %v762
    %vm764 = vweird.f32 %v584
    %vm765 = vweird.f32 %v759
    %vm766 = vmor %vm764, %vm765
    %v767 = vsel %vm766, %v759, %v763
    %v768 = vand.u32 2147483647, %v584
    %vm769 = vcmp.eq.f32.partialorder %v768, 8.507059e+37
    %v770 = vand.u32 %v584, 2147483648
    %v771 = vor.u32 1.1754944e-38, %v770
    %v772 = vsel %vm769, %v771, %v767
    %v773 = vrcp.pop %v586
    %v774 = vmul.f32 %v586, %v773
    %v775 = vsub.f32 1.0, %v774
    %v776 = vmul.f32 %v773, %v775
    %v777 = vadd.f32 %v773, %v776
    %vm778 = vweird.f32 %v586
    %vm779 = vweird.f32 %v773
    %vm780 = vmor %vm778, %vm779
    %v781 = vsel %vm780, %v773, %v777
    %v782 = vand.u32 2147483647, %v586
    %vm783 = vcmp.eq.f32.partialorder %v782, 8.507059e+37
    %v784 = vand.u32 %v586, 2147483648
    %v785 = vor.u32 1.1754944e-38, %v784
    %v786 = vsel %vm783, %v785, %v781
    %v787 = vrcp.pop %v588
    %v788 = vmul.f32 %v588, %v787
    %v789 = vsub.f32 1.0, %v788
    %v790 = vmul.f32 %v787, %v789
    %v791 = vadd.f32 %v787, %v790
    %vm792 = vweird.f32 %v588
    %vm793 = vweird.f32 %v787
    %vm794 = vmor %vm792, %vm793
    %v795 = vsel %vm794, %v787, %v791
    %v796 = vand.u32 2147483647, %v588
    %vm797 = vcmp.eq.f32.partialorder %v796, 8.507059e+37
    %v798 = vand.u32 %v588, 2147483648
    %v799 = vor.u32 1.1754944e-38, %v798
    %v800 = vsel %vm797, %v799, %v795
    %v801 = vrcp.pop %v590
    %v802 = vmul.f32 %v590, %v801
    %v803 = vsub.f32 1.0, %v802
    %v804 = vmul.f32 %v801, %v803
    %v805 = vadd.f32 %v801, %v804
    %vm806 = vweird.f32 %v590
    %vm807 = vweird.f32 %v801
    %vm808 = vmor %vm806, %vm807
    %v809 = vsel %vm808, %v801, %v805
    %v810 = vand.u32 2147483647, %v590
    %vm811 = vcmp.eq.f32.partialorder %v810, 8.507059e+37
    %v812 = vand.u32 %v590, 2147483648
    %v813 = vor.u32 1.1754944e-38, %v812
    %v814 = vsel %vm811, %v813, %v809
    %v815 = vmul.f32 %v528, %v604
    %v816 = vmul.f32 %v530, %v618
    %v817 = vmul.f32 %v532, %v632
    %v818 = vmul.f32 %v534, %v646
    %v819 = vmul.f32 %v536, %v660
    %v820 = vmul.f32 %v538, %v674
    %v821 = vmul.f32 %v540, %v688
    %v822 = vmul.f32 %v542, %v702
    %v823 = vmul.f32 %v544, %v716
    %v824 = vmul.f32 %v546, %v730
    %v825 = vmul.f32 %v548, %v744
    %v826 = vmul.f32 %v550, %v758
    %v827 = vmul.f32 %v552, %v772
    %v828 = vmul.f32 %v554, %v786
    %v829 = vmul.f32 %v556, %v800
    %v830 = vmul.f32 %v558, %v814
    %831 = vmatpush.msra.mxu0 %v219
    %832 = vmatpush.msra.mxu0 %v216
    %833 = vmatpush.msra.mxu0 %v213
    %834 = vmatpush.msra.mxu0 %v210
    %835 = vmatpush.msra.mxu0 %v207
    %836 = vmatpush.msra.mxu0 %v204
    %837 = vmatpush.msra.mxu0 %v201
    %838 = vmatpush.msra.mxu0 %v198
    %839 = vmatpush.msra.mxu0 %v195
    %840 = vmatpush.msra.mxu0 %v192
    %841 = vmatpush.msra.mxu0 %v189
    %842 = vmatpush.msra.mxu0 %v186
    %843 = vmatpush.msra.mxu0 %v183
    %844 = vmatpush.msra.mxu0 %v180
    %845 = vmatpush.msra.mxu0 %v177
    %846 = vmatpush.msra.mxu0 %v174
    %847 = vmatmul.f32.gmra.mxu0 %v815
    %v848 = vpop.f32.mrf.mxu0
    %v849 = vadd.f32 0.0, %v848
    %850 = vmatmul.f32.gmra.mxu0 %v816
    %v851 = vpop.f32.mrf.mxu0
    %v852 = vadd.f32 0.0, %v851
    %853 = vmatmul.f32.gmra.mxu0 %v817
    %v854 = vpop.f32.mrf.mxu0
    %v855 = vadd.f32 0.0, %v854
    %856 = vmatmul.f32.gmra.mxu0 %v818
    %v857 = vpop.f32.mrf.mxu0
    %v858 = vadd.f32 0.0, %v857
    %859 = vmatmul.f32.gmra.mxu0 %v819
    %v860 = vpop.f32.mrf.mxu0
    %v861 = vadd.f32 0.0, %v860
    %862 = vmatmul.f32.gmra.mxu0 %v820
    %v863 = vpop.f32.mrf.mxu0
    %v864 = vadd.f32 0.0, %v863
    %865 = vmatmul.f32.gmra.mxu0 %v821
    %v866 = vpop.f32.mrf.mxu0
    %v867 = vadd.f32 0.0, %v866
    %868 = vmatmul.f32.gmra.mxu0 %v822
    %v869 = vpop.f32.mrf.mxu0
    %v870 = vadd.f32 0.0, %v869
    %871 = vmatmul.f32.gmra.mxu0 %v823
    %v872 = vpop.f32.mrf.mxu0
    %v873 = vadd.f32 0.0, %v872
    %874 = vmatmul.f32.gmra.mxu0 %v824
    %v875 = vpop.f32.mrf.mxu0
    %v876 = vadd.f32 0.0, %v875
    %877 = vmatmul.f32.gmra.mxu0 %v825
    %v878 = vpop.f32.mrf.mxu0
    %v879 = vadd.f32 0.0, %v878
    %880 = vmatmul.f32.gmra.mxu0 %v826
    %v881 = vpop.f32.mrf.mxu0
    %v882 = vadd.f32 0.0, %v881
    %883 = vmatmul.f32.gmra.mxu0 %v827
    %v884 = vpop.f32.mrf.mxu0
    %v885 = vadd.f32 0.0, %v884
    %886 = vmatmul.f32.gmra.mxu0 %v828
    %v887 = vpop.f32.mrf.mxu0
    %v888 = vadd.f32 0.0, %v887
    %889 = vmatmul.f32.gmra.mxu0 %v829
    %v890 = vpop.f32.mrf.mxu0
    %v891 = vadd.f32 0.0, %v890
    %892 = vmatmul.f32.gmra.mxu0 %v830
    %v893 = vpop.f32.mrf.mxu0
    %v894 = vadd.f32 0.0, %v893
    %895 = vdwg.mxu0
    %v896 = vld [vmem:[#allocation5] sm:$0xff]
    %v897 = vld [vmem:[#allocation5 + $0x8] sm:$0xff]
    %v898 = vld [vmem:[#allocation5 + $0x10] sm:$0xff]
    %v899 = vld [vmem:[#allocation5 + $0x18] sm:$0xff]
    %v900 = vld [vmem:[#allocation5 + $0x20] sm:$0xff]
    %v901 = vld [vmem:[#allocation5 + $0x28] sm:$0xff]
    %v902 = vld [vmem:[#allocation5 + $0x30] sm:$0xff]
    %v903 = vld [vmem:[#allocation5 + $0x38] sm:$0xff]
    %v904 = vld [vmem:[#allocation5 + $0x40] sm:$0xff]
    %v905 = vld [vmem:[#allocation5 + $0x48] sm:$0xff]
    %v906 = vld [vmem:[#allocation5 + $0x50] sm:$0xff]
    %v907 = vld [vmem:[#allocation5 + $0x58] sm:$0xff]
    %v908 = vld [vmem:[#allocation5 + $0x60] sm:$0xff]
    %v909 = vld [vmem:[#allocation5 + $0x68] sm:$0xff]
    %v910 = vld [vmem:[#allocation5 + $0x70] sm:$0xff]
    %v911 = vld [vmem:[#allocation5 + $0x78] sm:$0xff]
    %v912 = vmul.f32 %v849, %v896
    %v913 = vmul.f32 %v852, %v897
    %v914 = vmul.f32 %v855, %v898
    %v915 = vmul.f32 %v858, %v899
    %v916 = vmul.f32 %v861, %v900
    %v917 = vmul.f32 %v864, %v901
    %v918 = vmul.f32 %v867, %v902
    %v919 = vmul.f32 %v870, %v903
    %v920 = vmul.f32 %v873, %v904
    %v921 = vmul.f32 %v876, %v905
    %v922 = vmul.f32 %v879, %v906
    %v923 = vmul.f32 %v882, %v907
    %v924 = vmul.f32 %v885, %v908
    %v925 = vmul.f32 %v888, %v909
    %v926 = vmul.f32 %v891, %v910
    %v927 = vmul.f32 %v894, %v911
    %v928 = vld [vmem:[%s5] sm:$0xff]
    %v929 = vld [vmem:[%s5 + $0x8] sm:$0xff]
    %v930 = vld [vmem:[%s5 + $0x10] sm:$0xff]
    %v931 = vld [vmem:[%s5 + $0x18] sm:$0xff]
    %932 = vmatpush.msra.mxu0 %v927
    %933 = vmatpush.msra.mxu0 %v926
    %934 = vmatpush.msra.mxu0 %v925
    %935 = vmatpush.msra.mxu0 %v924
    %936 = vmatpush.msra.mxu0 %v923
    %937 = vmatpush.msra.mxu0 %v922
    %938 = vmatpush.msra.mxu0 %v921
    %939 = vmatpush.msra.mxu0 %v920
    %940 = vmatpush.msra.mxu0 %v919
    %941 = vmatpush.msra.mxu0 %v918
    %942 = vmatpush.msra.mxu0 %v917
    %943 = vmatpush.msra.mxu0 %v916
    %944 = vmatpush.msra.mxu0 %v915
    %945 = vmatpush.msra.mxu0 %v914
    %946 = vmatpush.msra.mxu0 %v913
    %947 = vmatpush.msra.mxu0 %v912
    %948 = vmatmul.f32.gmra.mxu0 %v928
    %v949 = vpop.f32.mrf.mxu0
    %v950 = vadd.f32 0.0, %v949
    %951 = vmatmul.f32.gmra.mxu0 %v929
    %v952 = vpop.f32.mrf.mxu0
    %v953 = vadd.f32 0.0, %v952
    %954 = vmatmul.f32.gmra.mxu0 %v930
    %v955 = vpop.f32.mrf.mxu0
    %v956 = vadd.f32 0.0, %v955
    %957 = vmatmul.f32.gmra.mxu0 %v931
    %v958 = vpop.f32.mrf.mxu0
    %v959 = vadd.f32 0.0, %v958
    %960 = vdwg.mxu0
    %v961 = vld [vmem:[#allocation7] sm:$0xff]
    %v962 = vld [vmem:[#allocation7 + $0x8] sm:$0xff]
    %v963 = vld [vmem:[#allocation7 + $0x10] sm:$0xff]
    %v964 = vld [vmem:[#allocation7 + $0x18] sm:$0xff]
    %v965 = vld [vmem:[#allocation7 + $0x20] sm:$0xff]
    %v966 = vld [vmem:[#allocation7 + $0x28] sm:$0xff]
    %v967 = vld [vmem:[#allocation7 + $0x30] sm:$0xff]
    %v968 = vld [vmem:[#allocation7 + $0x38] sm:$0xff]
    %v969 = vld [vmem:[#allocation7 + $0x40] sm:$0xff]
    %v970 = vld [vmem:[#allocation7 + $0x48] sm:$0xff]
    %v971 = vld [vmem:[#allocation7 + $0x50] sm:$0xff]
    %v972 = vld [vmem:[#allocation7 + $0x58] sm:$0xff]
    %v973 = vld [vmem:[#allocation7 + $0x60] sm:$0xff]
    %v974 = vld [vmem:[#allocation7 + $0x68] sm:$0xff]
    %v975 = vld [vmem:[#allocation7 + $0x70] sm:$0xff]
    %v976 = vld [vmem:[#allocation7 + $0x78] sm:$0xff]
    %v977 = vld [vmem:[%s7] sm:$0x1]
    %v979 = vperm.slane %v977, 0
    %981 = vmatpush.msra.mxu0 %v976
    %982 = vmatpush.msra.mxu0 %v975
    %983 = vmatpush.msra.mxu0 %v974
    %984 = vmatpush.msra.mxu0 %v973
    %985 = vmatpush.msra.mxu0 %v972
    %986 = vmatpush.msra.mxu0 %v971
    %987 = vmatpush.msra.mxu0 %v970
    %988 = vmatpush.msra.mxu0 %v969
    %989 = vmatpush.msra.mxu0 %v968
    %990 = vmatpush.msra.mxu0 %v967
    %991 = vmatpush.msra.mxu0 %v966
    %992 = vmatpush.msra.mxu0 %v965
    %993 = vmatpush.msra.mxu0 %v964
    %994 = vmatpush.msra.mxu0 %v963
    %995 = vmatpush.msra.mxu0 %v962
    %996 = vmatpush.msra.mxu0 %v961
    %997 = vmatmul.f32.gmra.mxu0 %v950
    %v998 = vpop.f32.mrf.mxu0
    %v999 = vadd.f32 %v979, %v998
    %1000 = vmatmul.f32.gmra.mxu0 %v953
    %v1001 = vpop.f32.mrf.mxu0
    %v1002 = vadd.f32 %v979, %v1001
    %1003 = vmatmul.f32.gmra.mxu0 %v956
    %v1004 = vpop.f32.mrf.mxu0
    %v1005 = vadd.f32 %v979, %v1004
    %1006 = vmatmul.f32.gmra.mxu0 %v959
    %v1007 = vpop.f32.mrf.mxu0
    %v1008 = vadd.f32 %v979, %v1007
    %1009 = vdwg.mxu0
    %1010 = vst [vmem:[#allocation8] sm:$0xff] %v999
    %1011 = vst [vmem:[#allocation8 + $0x8] sm:$0xff] %v1002
    %1012 = vst [vmem:[#allocation8 + $0x10] sm:$0xff] %v1005
    %1013 = vst [vmem:[#allocation8 + $0x18] sm:$0xff] %v1008
    // Predicated region
    $region46: #{tpu_custom_call.1} parent=1 // pred_check
      _
    $region47: #{tpu_custom_call.1} parent=1 // pred_check_branch
      %1015 = sbr.rel (0) target = $region49
    $region48: #{tpu_custom_call.1} parent=1 // pred_region
      %1017 = vsyncadd [#allocation4], 0
      %s1018 = sshll.u32 [#allocation8], 4
      %s1019 = int_to_ptr.vmem [resolvable:$true] %s1018
      %s1020 = sshll.u32 %s8, 4
      %s1021 = int_to_ptr.hbm [resolvable:$true] %s1020
      %1026 = dma.vmem_to_hbm [thread:$0]  %s1019, 512, %s1021, [#allocation4], 128, 128, 8
    $region49: #{tpu_custom_call.1} parent=1 // pred_fallthru
      _
    // Predicated region
    $region50: #{tpu_custom_call.1} parent=1 // pred_check
      _
    $region51: #{tpu_custom_call.1} parent=1 // pred_check_branch
      %1028 = sbr.rel (0) target = $region53
    $region52: #{tpu_custom_call.1} parent=1 // pred_region
      %1030 = dma.done [#allocation4], 512
    $region53: #{tpu_custom_call.1} parent=1 // pred_fallthru
      _
    %1031 = vsyncpa [#allocation3], 1
    %1032 = vsyncpa [#allocation6], 1
    %1033 = vsyncpa [#allocation4], 1

</llo_original>
